<compile_context>
chip_gen: v5e
topology: v5e:2x2
jax: 0.10.0
libtpu: 0.0.40
codegen_flags: <defaults>
</compile_context>

<pallas_src>
from functools import lru_cache

import numpy as np
import jax
import jax.numpy as jnp
from jax.experimental import pallas as pl
from jax.experimental.pallas import tpu as pltpu


# --------------------- Pallas kernel 1: fused 1x1 convs + bias + add ----------------------
def _fused_head_kernel(c1_ref, c4_ref, w_aux_ref, w_proj_ref, b_ref, o_ref):
    # c1_ref: (C1, T) bf16   c4_ref: (C4, T) bf16   w_*: (K, C*) bf16 resident
    # b_ref: (K, 1) f32 resident   o_ref: (K, T) f32
    acc = jnp.dot(w_aux_ref[...], c1_ref[...], preferred_element_type=jnp.float32)
    acc = acc + jnp.dot(w_proj_ref[...], c4_ref[...], preferred_element_type=jnp.float32)
    o_ref[...] = (acc + b_ref[...]).astype(o_ref.dtype)


def _pick_hw_tile(hw_p, c_in_total, k, budget_bytes=40 * 1024 * 1024):
    """Largest lane-dense spatial tile whose double-buffered footprint fits the budget."""
    for cand in (32768, 16384, 8192, 4096, 2048, 1024, 512, 256, 128):
        if hw_p % cand == 0:
            need = 2 * c_in_total * cand * 2 + 2 * k * cand * 4  # bf16 ins + f32 out, x2 buffers
            if need <= budget_bytes:
                return cand
    return hw_p


def fused_head_1x1(c1, c4, w_aux, w_proj, bias):
    """c1: (N, C1, hw_p) bf16, c4: (N, C4, hw_p) bf16, w_aux: (K, C1), w_proj: (K, C4),
    bias: (K, 1) f32  ->  (N, K, hw_p) f32."""
    N, C1, hw_p = c1.shape
    C4 = c4.shape[1]
    K = w_aux.shape[0]
    t_hw = _pick_hw_tile(hw_p, C1 + C4, K)
    grid = (N, hw_p // t_hw)
    return pl.pallas_call(
        _fused_head_kernel,
        out_shape=jax.ShapeDtypeStruct((N, K, hw_p), jnp.float32),
        grid=grid,
        in_specs=[
            pl.BlockSpec((None, C1, t_hw), lambda n, t: (n, 0, t)),   # c1 tile
            pl.BlockSpec((None, C4, t_hw), lambda n, t: (n, 0, t)),   # c4 tile
            pl.BlockSpec((K, C1), lambda n, t: (0, 0)),               # weights resident
            pl.BlockSpec((K, C4), lambda n, t: (0, 0)),
            pl.BlockSpec((K, 1), lambda n, t: (0, 0)),                # bias resident
        ],
        out_specs=pl.BlockSpec((None, K, t_hw), lambda n, t: (n, 0, t)),
        compiler_params=pltpu.CompilerParams(
            dimension_semantics=("parallel", "parallel"),
            vmem_limit_bytes=48 * 1024 * 1024,
        ),
    )(c1, c4, w_aux, w_proj, bias)


# -------- Pallas kernel 2: bilinear upsample (align_corners=True), H-tiled output ---------
def _bilinear_nchw_kernel(feat_ref, a_h_ref, a_wt_ref, o_ref):
    # feat_ref: (K, h, w) f32 resident ; a_h_ref: (TILE_H, h) f32 ; a_wt_ref: (w, W) f32
    # o_ref: (K, TILE_H, W) f32
    K = feat_ref.shape[0]
    a_h = a_h_ref[...]
    a_wt = a_wt_ref[...]
    # height pass per class (static unroll over small K), then one fused width matmul
    rows = [jnp.dot(a_h, feat_ref[k], preferred_element_type=jnp.float32) for k in range(K)]
    g = jnp.concatenate(rows, axis=0)                              # (K*TILE_H, w)
    out = jnp.dot(g, a_wt, preferred_element_type=jnp.float32)     # (K*TILE_H, W)
    o_ref[...] = out.reshape(o_ref.shape)


def _pick_h_tile(H, K, W, budget_bytes=16 * 1024 * 1024):
    """Largest 8-multiple divisor of H whose double-buffered f32 output block fits budget."""
    for cand in (1024, 512, 256, 128, 64, 32, 16, 8):
        if cand <= H and H % cand == 0 and 2 * K * cand * W * 4 <= budget_bytes:
            return cand
    return H  # tiny / odd maps: single full block


def bilinear_upsample_nchw(feat, a_h, a_wt):
    """feat: (N, K, h, w) f32 -> (N, K, H, W) f32, directly in NCHW."""
    N, K, h, w = feat.shape
    H = a_h.shape[0]
    W = a_wt.shape[1]
    t_h = _pick_h_tile(H, K, W)
    grid = (N, H // t_h)
    return pl.pallas_call(
        _bilinear_nchw_kernel,
        out_shape=jax.ShapeDtypeStruct((N, K, H, W), jnp.float32),
        grid=grid,
        in_specs=[
            pl.BlockSpec((None, K, h, w), lambda n, th: (n, 0, 0, 0)),   # resident per batch
            pl.BlockSpec((t_h, h), lambda n, th: (th, 0)),               # H-tile of weights
            pl.BlockSpec((w, W), lambda n, th: (0, 0)),                  # resident
        ],
        out_specs=pl.BlockSpec((None, K, t_h, W), lambda n, th: (n, 0, th, 0)),
        compiler_params=pltpu.CompilerParams(
            dimension_semantics=("parallel", "parallel"),
            vmem_limit_bytes=48 * 1024 * 1024,
        ),
    )(feat, a_h, a_wt)


# ------------------------------------ glue (plain JAX) --------------------------------------
@lru_cache(maxsize=None)
def _align_corners_matrix_np(n_out, n_in):
    """Pure-numpy (cache-safe) align_corners=True interpolation matrix, row i = 2 taps."""
    A = np.zeros((n_out, n_in), np.float32)
    if n_out == 1:
        A[0, 0] = 1.0
        return A
    scale = (n_in - 1) / (n_out - 1)
    for i in range(n_out):
        src = i * scale
        i0 = min(int(np.floor(src)), n_in - 1)
        i1 = min(i0 + 1, n_in - 1)
        frac = src - i0
        A[i, i0] += 1.0 - frac
        A[i, i1] += frac
    return A


def init_params(key, nclass=8, width_multi=1.0, in_ch=3):
    inter_channels = int(24 * width_multi)   # auxlayer: Conv2d(24, nclass, 1, 1)
    proj_in = 256 // 2                       # project:  Conv2d(128, nclass, 1, 1)
    k = jax.random.split(key, 6)
    return dict(
        w_aux=jax.random.normal(k[0], (inter_channels, nclass), jnp.float32) * 0.05,
        b_aux=jax.random.normal(k[1], (nclass,), jnp.float32) * 0.05,
        w_proj=jax.random.normal(k[2], (proj_in, nclass), jnp.float32) * 0.05,
        b_proj=jax.random.normal(k[3], (nclass,), jnp.float32) * 0.05,
        # deterministic stand-in for the (unprovided) MobileNetV2 backbone + _Head
        stub_w1=jax.random.normal(k[4], (in_ch, inter_channels), jnp.float32) * 0.1,
        stub_w4=jax.random.normal(k[5], (in_ch, proj_in), jnp.float32) * 0.1,
    )


def _backbone_stub(x, params):
    # TODO(synk): _MobileNetV2Seg.base_forward (MobileNetV2 backbone) and _Head were not
    # provided in the reference source; this deterministic stride-4 linear stub stands in,
    # producing c1 (24 ch) and c4 (128 ch) channels-first feature maps at H/4 x W/4.
    # QuantStub/DeQuantStub are identity in float mode.
    N, Cin, H, W = x.shape
    assert H % 4 == 0 and W % 4 == 0, "stub backbone requires H and W divisible by 4"
    h, w = H // 4, W // 4
    xp = x.reshape(N, Cin, h, 4, w, 4).mean(axis=(3, 5))           # (N, Cin, h, w)
    xp_flat = xp.reshape(N, Cin, h * w)                            # (N, Cin, hw)
    c1 = jnp.einsum('cf,nci->nfi', params["stub_w1"], xp_flat)     # (N, 24, hw)
    c4 = jnp.einsum('cf,nci->nfi', params["stub_w4"], xp_flat)     # (N, 128, hw)
    return c1, c4, h, w


def _prep_head_operands(params, compute_dtype=jnp.bfloat16):
    w_aux = params["w_aux"].T.astype(compute_dtype)                  # (K, 24)
    w_proj = params["w_proj"].T.astype(compute_dtype)                # (K, 128)
    bias = (params["b_aux"] + params["b_proj"])[:, None].astype(jnp.float32)  # (K, 1)
    return w_aux, w_proj, bias


def mobilenetv2_seg_forward(x, params, nclass=8):
    N, Cin, H, W = x.shape
    c1, c4, h, w = _backbone_stub(x, params)
    w_aux, w_proj, bias = _prep_head_operands(params)

    c1b = c1.astype(jnp.bfloat16)
    c4b = c4.astype(jnp.bfloat16)
    hw = h * w
    hw_p = ((hw + 127) // 128) * 128          # lane-dense padding for odd resolutions
    if hw_p != hw:
        pad = ((0, 0), (0, 0), (0, hw_p - hw))
        c1b = jnp.pad(c1b, pad)
        c4b = jnp.pad(c4b, pad)

    # auxlayer(c1) + project(c4) + bias + add, fused into two MXU dots per tile
    out_flat = fused_head_1x1(c1b, c4b, w_aux, w_proj, bias)         # (N, K, hw_p) f32
    feat = out_flat[:, :, :hw].reshape(N, nclass, h, w)              # (N, K, h, w) f32

    a_h = jnp.asarray(_align_corners_matrix_np(H, h))                # f32, built in numpy
    a_wt = jnp.asarray(_align_corners_matrix_np(W, w)).T
    return bilinear_upsample_nchw(feat, a_h, a_wt)                   # (N, K, H, W) f32, NCHW


def reference_forward(x, params, nclass=8):
    """Pure-jnp mirror of the same (bf16-head-operand, f32-accumulate, f32-interp) math."""
    N, Cin, H, W = x.shape
    c1, c4, h, w = _backbone_stub(x, params)
    w_aux, w_proj, bias = _prep_head_operands(params)
    c1b = c1.astype(jnp.bfloat16)
    c4b = c4.astype(jnp.bfloat16)
    feat = (jnp.einsum('kc,nci->nki', w_aux, c1b, preferred_element_type=jnp.float32)
            + jnp.einsum('kc,nci->nki', w_proj, c4b, preferred_element_type=jnp.float32)
            + bias[None])
    feat = feat.reshape(N, nclass, h, w)
    a_h = jnp.asarray(_align_corners_matrix_np(H, h))
    a_wt = jnp.asarray(_align_corners_matrix_np(W, w)).T
    g = jnp.einsum('Hh,nkhw->nkHw', a_h, feat, preferred_element_type=jnp.float32)
    return jnp.einsum('nkHw,wW->nkHW', g, a_wt, preferred_element_type=jnp.float32)


if __name__ == "__main__":
    nclass = 8
    key = jax.random.PRNGKey(0)
    kx, kp = jax.random.split(key)
    x = jax.random.normal(kx, (2, 3, 16, 16), jnp.float32)   # NCHW input image
    params = init_params(kp, nclass=nclass)

    fwd = jax.jit(mobilenetv2_seg_forward, static_argnames=("nclass",))
    out = jax.block_until_ready(fwd(x, params, nclass=nclass))

    ref = jax.block_until_ready(reference_forward(x, params, nclass=nclass))
    assert out.shape == (2, nclass, 16, 16), out.shape
    err = float(jnp.max(jnp.abs(out - ref)))
    assert err < 5e-3, err

    print("KERNEL_OK")
</pallas_src>

<mosaic_0001>
module attributes {stable_mosaic.version = 11 : i64} {
  func.func @_fused_head_kernel(%arg0: i32, %arg1: i32, %arg2: memref<1x24x128xbf16, #tpu.memory_space<vmem>>, %arg3: memref<1x128x128xbf16, #tpu.memory_space<vmem>>, %arg4: memref<8x24xbf16, #tpu.memory_space<vmem>>, %arg5: memref<8x128xbf16, #tpu.memory_space<vmem>>, %arg6: memref<8x1xf32, #tpu.memory_space<vmem>>, %arg7: memref<1x8x128xf32, #tpu.memory_space<vmem>>) attributes {dimension_semantics = [#tpu.dimension_semantics<parallel>, #tpu.dimension_semantics<parallel>], iteration_bounds = array<i64: 2, 1>, scalar_prefetch = 0 : i64, scratch_operands = 0 : i64, tpu.core_type = #tpu.core_type<tc>, window_params = [{transform_indices = @transform_0, window_bounds = array<i64: 1, 24, 128>}, {transform_indices = @transform_1, window_bounds = array<i64: 1, 128, 128>}, {pipeline_mode = #tpu.pipeline_mode<synchronous>, transform_indices = @transform_2, window_bounds = array<i64: 8, 24>}, {pipeline_mode = #tpu.pipeline_mode<synchronous>, transform_indices = @transform_3, window_bounds = array<i64: 8, 128>}, {pipeline_mode = #tpu.pipeline_mode<synchronous>, transform_indices = @transform_4, window_bounds = array<i64: 8, 1>}, {transform_indices = @transform_5, window_bounds = array<i64: 1, 8, 128>}]} {
    %c0 = arith.constant 0 : index
    %c0_0 = arith.constant 0 : index
    %0 = vector.load %arg4[%c0, %c0_0] : memref<8x24xbf16, #tpu.memory_space<vmem>>, vector<8x24xbf16>
    %c0_1 = arith.constant 0 : index
    %c0_2 = arith.constant 0 : index
    %c0_3 = arith.constant 0 : index
    %1 = vector.load %arg2[%c0_1, %c0_2, %c0_3] : memref<1x24x128xbf16, #tpu.memory_space<vmem>>, vector<1x24x128xbf16>
    %2 = vector.shape_cast %1 : vector<1x24x128xbf16> to vector<24x128xbf16>
    %cst = arith.constant dense<0.000000e+00> : vector<8x128xf32>
    %3 = tpu.matmul %0, %2, %cst {dimension_numbers = #tpu.dot_dimension_numbers<[1], [0], [0], [1], [0, 0, 1, 1], [], []>} : vector<8x24xbf16>, vector<24x128xbf16>, vector<8x128xf32> -> vector<8x128xf32>
    %c0_4 = arith.constant 0 : index
    %c0_5 = arith.constant 0 : index
    %4 = vector.load %arg5[%c0_4, %c0_5] : memref<8x128xbf16, #tpu.memory_space<vmem>>, vector<8x128xbf16>
    %c0_6 = arith.constant 0 : index
    %c0_7 = arith.constant 0 : index
    %c0_8 = arith.constant 0 : index
    %5 = vector.load %arg3[%c0_6, %c0_7, %c0_8] : memref<1x128x128xbf16, #tpu.memory_space<vmem>>, vector<1x128x128xbf16>
    %6 = vector.shape_cast %5 : vector<1x128x128xbf16> to vector<128x128xbf16>
    %cst_9 = arith.constant dense<0.000000e+00> : vector<8x128xf32>
    %7 = tpu.matmul %4, %6, %cst_9 {dimension_numbers = #tpu.dot_dimension_numbers<[1], [0], [0], [1], [0, 0, 1, 1], [], []>} : vector<8x128xbf16>, vector<128x128xbf16>, vector<8x128xf32> -> vector<8x128xf32>
    %8 = arith.addf %3, %7 : vector<8x128xf32>
    %c0_10 = arith.constant 0 : index
    %c0_11 = arith.constant 0 : index
    %9 = vector.load %arg6[%c0_10, %c0_11] : memref<8x1xf32, #tpu.memory_space<vmem>>, vector<8x1xf32>
    %10 = vector.broadcast %9 : vector<8x1xf32> to vector<8x128xf32>
    %11 = arith.addf %8, %10 : vector<8x128xf32>
    %c0_12 = arith.constant 0 : index
    %c0_13 = arith.constant 0 : index
    %c0_14 = arith.constant 0 : index
    %12 = vector.load %arg7[%c0_12, %c0_13, %c0_14] : memref<1x8x128xf32, #tpu.memory_space<vmem>>, vector<1x8x128xf32>
    %13 = vector.shape_cast %12 : vector<1x8x128xf32> to vector<8x128xf32>
    %14 = vector.shape_cast %11 : vector<8x128xf32> to vector<1x8x128xf32>
    tpu.vector_store %arg7[%c0_12, %c0_13, %c0_14], %14 {strides = array<i32>} : memref<1x8x128xf32, #tpu.memory_space<vmem>>, vector<1x8x128xf32>,
    return
  }
  func.func @transform_0(%arg0: i32, %arg1: i32) -> (i32, i32, i32) {
    %c0_i32 = arith.constant 0 : i32
    %c0_i32_0 = arith.constant 0 : i32
    return %arg0, %c0_i32, %arg1 : i32, i32, i32
  }
  func.func @transform_1(%arg0: i32, %arg1: i32) -> (i32, i32, i32) {
    %c0_i32 = arith.constant 0 : i32
    %c0_i32_0 = arith.constant 0 : i32
    return %arg0, %c0_i32, %arg1 : i32, i32, i32
  }
  func.func @transform_2(%arg0: i32, %arg1: i32) -> (i32, i32) {
    %c0_i32 = arith.constant 0 : i32
    %c0_i32_0 = arith.constant 0 : i32
    %c0_i32_1 = arith.constant 0 : i32
    return %c0_i32, %c0_i32_0 : i32, i32
  }
  func.func @transform_3(%arg0: i32, %arg1: i32) -> (i32, i32) {
    %c0_i32 = arith.constant 0 : i32
    %c0_i32_0 = arith.constant 0 : i32
    %c0_i32_1 = arith.constant 0 : i32
    return %c0_i32, %c0_i32_0 : i32, i32
  }
  func.func @transform_4(%arg0: i32, %arg1: i32) -> (i32, i32) {
    %c0_i32 = arith.constant 0 : i32
    %c0_i32_0 = arith.constant 0 : i32
    %c0_i32_1 = arith.constant 0 : i32
    return %c0_i32, %c0_i32_0 : i32, i32
  }
  func.func @transform_5(%arg0: i32, %arg1: i32) -> (i32, i32, i32) {
    %c0_i32 = arith.constant 0 : i32
    %c0_i32_0 = arith.constant 0 : i32
    return %arg0, %c0_i32, %arg1 : i32, i32, i32
  }
}

module attributes {stable_mosaic.version = 11 : i64} {
  func.func @_bilinear_nchw_kernel(%arg0: i32, %arg1: i32, %arg2: memref<1x8x4x4xf32, #tpu.memory_space<vmem>>, %arg3: memref<16x4xf32, #tpu.memory_space<vmem>>, %arg4: memref<4x16xf32, #tpu.memory_space<vmem>>, %arg5: memref<1x8x16x16xf32, #tpu.memory_space<vmem>>) attributes {dimension_semantics = [#tpu.dimension_semantics<parallel>, #tpu.dimension_semantics<parallel>], iteration_bounds = array<i64: 2, 1>, scalar_prefetch = 0 : i64, scratch_operands = 0 : i64, tpu.core_type = #tpu.core_type<tc>, window_params = [{transform_indices = @transform_0, window_bounds = array<i64: 1, 8, 4, 4>}, {transform_indices = @transform_1, window_bounds = array<i64: 16, 4>}, {pipeline_mode = #tpu.pipeline_mode<synchronous>, transform_indices = @transform_2, window_bounds = array<i64: 4, 16>}, {transform_indices = @transform_3, window_bounds = array<i64: 1, 8, 16, 16>}]} {
    %c0 = arith.constant 0 : index
    %c0_0 = arith.constant 0 : index
    %0 = vector.load %arg3[%c0, %c0_0] : memref<16x4xf32, #tpu.memory_space<vmem>>, vector<16x4xf32>
    %c0_1 = arith.constant 0 : index
    %c0_2 = arith.constant 0 : index
    %1 = vector.load %arg4[%c0_1, %c0_2] : memref<4x16xf32, #tpu.memory_space<vmem>>, vector<4x16xf32>
    %c0_3 = arith.constant 0 : index
    %c0_4 = arith.constant 0 : index
    %c0_5 = arith.constant 0 : index
    %c0_6 = arith.constant 0 : index
    %2 = vector.load %arg2[%c0_3, %c0_4, %c0_5, %c0_6] : memref<1x8x4x4xf32, #tpu.memory_space<vmem>>, vector<1x1x4x4xf32>
    %3 = vector.shape_cast %2 : vector<1x1x4x4xf32> to vector<4x4xf32>
    %cst = arith.constant dense<0.000000e+00> : vector<16x4xf32>
    %4 = tpu.matmul %0, %3, %cst {dimension_numbers = #tpu.dot_dimension_numbers<[1], [0], [0], [1], [0, 0, 1, 1], [], []>} : vector<16x4xf32>, vector<4x4xf32>, vector<16x4xf32> -> vector<16x4xf32>
    %c0_7 = arith.constant 0 : index
    %c1 = arith.constant 1 : index
    %c0_8 = arith.constant 0 : index
    %c0_9 = arith.constant 0 : index
    %5 = vector.load %arg2[%c0_7, %c1, %c0_8, %c0_9] : memref<1x8x4x4xf32, #tpu.memory_space<vmem>>, vector<1x1x4x4xf32>
    %6 = vector.shape_cast %5 : vector<1x1x4x4xf32> to vector<4x4xf32>
    %cst_10 = arith.constant dense<0.000000e+00> : vector<16x4xf32>
    %7 = tpu.matmul %0, %6, %cst_10 {dimension_numbers = #tpu.dot_dimension_numbers<[1], [0], [0], [1], [0, 0, 1, 1], [], []>} : vector<16x4xf32>, vector<4x4xf32>, vector<16x4xf32> -> vector<16x4xf32>
    %c0_11 = arith.constant 0 : index
    %c2 = arith.constant 2 : index
    %c0_12 = arith.constant 0 : index
    %c0_13 = arith.constant 0 : index
    %8 = vector.load %arg2[%c0_11, %c2, %c0_12, %c0_13] : memref<1x8x4x4xf32, #tpu.memory_space<vmem>>, vector<1x1x4x4xf32>
    %9 = vector.shape_cast %8 : vector<1x1x4x4xf32> to vector<4x4xf32>
    %cst_14 = arith.constant dense<0.000000e+00> : vector<16x4xf32>
    %10 = tpu.matmul %0, %9, %cst_14 {dimension_numbers = #tpu.dot_dimension_numbers<[1], [0], [0], [1], [0, 0, 1, 1], [], []>} : vector<16x4xf32>, vector<4x4xf32>, vector<16x4xf32> -> vector<16x4xf32>
    %c0_15 = arith.constant 0 : index
    %c3 = arith.constant 3 : index
    %c0_16 = arith.constant 0 : index
    %c0_17 = arith.constant 0 : index
    %11 = vector.load %arg2[%c0_15, %c3, %c0_16, %c0_17] : memref<1x8x4x4xf32, #tpu.memory_space<vmem>>, vector<1x1x4x4xf32>
    %12 = vector.shape_cast %11 : vector<1x1x4x4xf32> to vector<4x4xf32>
    %cst_18 = arith.constant dense<0.000000e+00> : vector<16x4xf32>
    %13 = tpu.matmul %0, %12, %cst_18 {dimension_numbers = #tpu.dot_dimension_numbers<[1], [0], [0], [1], [0, 0, 1, 1], [], []>} : vector<16x4xf32>, vector<4x4xf32>, vector<16x4xf32> -> vector<16x4xf32>
    %c0_19 = arith.constant 0 : index
    %c4 = arith.constant 4 : index
    %c0_20 = arith.constant 0 : index
    %c0_21 = arith.constant 0 : index
    %14 = vector.load %arg2[%c0_19, %c4, %c0_20, %c0_21] : memref<1x8x4x4xf32, #tpu.memory_space<vmem>>, vector<1x1x4x4xf32>
    %15 = vector.shape_cast %14 : vector<1x1x4x4xf32> to vector<4x4xf32>
    %cst_22 = arith.constant dense<0.000000e+00> : vector<16x4xf32>
    %16 = tpu.matmul %0, %15, %cst_22 {dimension_numbers = #tpu.dot_dimension_numbers<[1], [0], [0], [1], [0, 0, 1, 1], [], []>} : vector<16x4xf32>, vector<4x4xf32>, vector<16x4xf32> -> vector<16x4xf32>
    %c0_23 = arith.constant 0 : index
    %c5 = arith.constant 5 : index
    %c0_24 = arith.constant 0 : index
    %c0_25 = arith.constant 0 : index
    %17 = vector.load %arg2[%c0_23, %c5, %c0_24, %c0_25] : memref<1x8x4x4xf32, #tpu.memory_space<vmem>>, vector<1x1x4x4xf32>
    %18 = vector.shape_cast %17 : vector<1x1x4x4xf32> to vector<4x4xf32>
    %cst_26 = arith.constant dense<0.000000e+00> : vector<16x4xf32>
    %19 = tpu.matmul %0, %18, %cst_26 {dimension_numbers = #tpu.dot_dimension_numbers<[1], [0], [0], [1], [0, 0, 1, 1], [], []>} : vector<16x4xf32>, vector<4x4xf32>, vector<16x4xf32> -> vector<16x4xf32>
    %c0_27 = arith.constant 0 : index
    %c6 = arith.constant 6 : index
    %c0_28 = arith.constant 0 : index
    %c0_29 = arith.constant 0 : index
    %20 = vector.load %arg2[%c0_27, %c6, %c0_28, %c0_29] : memref<1x8x4x4xf32, #tpu.memory_space<vmem>>, vector<1x1x4x4xf32>
    %21 = vector.shape_cast %20 : vector<1x1x4x4xf32> to vector<4x4xf32>
    %cst_30 = arith.constant dense<0.000000e+00> : vector<16x4xf32>
    %22 = tpu.matmul %0, %21, %cst_30 {dimension_numbers = #tpu.dot_dimension_numbers<[1], [0], [0], [1], [0, 0, 1, 1], [], []>} : vector<16x4xf32>, vector<4x4xf32>, vector<16x4xf32> -> vector<16x4xf32>
    %c0_31 = arith.constant 0 : index
    %c7 = arith.constant 7 : index
    %c0_32 = arith.constant 0 : index
    %c0_33 = arith.constant 0 : index
    %23 = vector.load %arg2[%c0_31, %c7, %c0_32, %c0_33] : memref<1x8x4x4xf32, #tpu.memory_space<vmem>>, vector<1x1x4x4xf32>
    %24 = vector.shape_cast %23 : vector<1x1x4x4xf32> to vector<4x4xf32>
    %cst_34 = arith.constant dense<0.000000e+00> : vector<16x4xf32>
    %25 = tpu.matmul %0, %24, %cst_34 {dimension_numbers = #tpu.dot_dimension_numbers<[1], [0], [0], [1], [0, 0, 1, 1], [], []>} : vector<16x4xf32>, vector<4x4xf32>, vector<16x4xf32> -> vector<16x4xf32>
    %26 = tpu.concatenate %4, %7, %10, %13, %16, %19, %22, %25 in 0 : vector<16x4xf32>, vector<16x4xf32>, vector<16x4xf32>, vector<16x4xf32>, vector<16x4xf32>, vector<16x4xf32>, vector<16x4xf32>, vector<16x4xf32> -> vector<128x4xf32>
    %cst_35 = arith.constant dense<0.000000e+00> : vector<128x16xf32>
    %27 = tpu.matmul %26, %1, %cst_35 {dimension_numbers = #tpu.dot_dimension_numbers<[1], [0], [0], [1], [0, 0, 1, 1], [], []>} : vector<128x4xf32>, vector<4x16xf32>, vector<128x16xf32> -> vector<128x16xf32>
    %28 = vector.shape_cast %27 : vector<128x16xf32> to vector<8x16x16xf32>
    %c0_36 = arith.constant 0 : index
    %c0_37 = arith.constant 0 : index
    %c0_38 = arith.constant 0 : index
    %c0_39 = arith.constant 0 : index
    %29 = vector.load %arg5[%c0_36, %c0_37, %c0_38, %c0_39] : memref<1x8x16x16xf32, #tpu.memory_space<vmem>>, vector<1x8x16x16xf32>
    %30 = vector.shape_cast %29 : vector<1x8x16x16xf32> to vector<8x16x16xf32>
    %31 = vector.shape_cast %28 : vector<8x16x16xf32> to vector<1x8x16x16xf32>
    tpu.vector_store %arg5[%c0_36, %c0_37, %c0_38, %c0_39], %31 {strides = array<i32>} : memref<1x8x16x16xf32, #tpu.memory_space<vmem>>, vector<1x8x16x16xf32>,
    return
  }
  func.func @transform_0(%arg0: i32, %arg1: i32) -> (i32, i32, i32, i32) {
    %c0_i32 = arith.constant 0 : i32
    %c0_i32_0 = arith.constant 0 : i32
    %c0_i32_1 = arith.constant 0 : i32
    %c0_i32_2 = arith.constant 0 : i32
    return %arg0, %c0_i32, %c0_i32_0, %c0_i32_1 : i32, i32, i32, i32
  }
  func.func @transform_1(%arg0: i32, %arg1: i32) -> (i32, i32) {
    %c0_i32 = arith.constant 0 : i32
    %c0_i32_0 = arith.constant 0 : i32
    return %arg1, %c0_i32 : i32, i32
  }
  func.func @transform_2(%arg0: i32, %arg1: i32) -> (i32, i32) {
    %c0_i32 = arith.constant 0 : i32
    %c0_i32_0 = arith.constant 0 : i32
    %c0_i32_1 = arith.constant 0 : i32
    return %c0_i32, %c0_i32_0 : i32, i32
  }
  func.func @transform_3(%arg0: i32, %arg1: i32) -> (i32, i32, i32, i32) {
    %c0_i32 = arith.constant 0 : i32
    %c0_i32_0 = arith.constant 0 : i32
    %c0_i32_1 = arith.constant 0 : i32
    return %arg0, %c0_i32, %arg1, %c0_i32_0 : i32, i32, i32, i32
  }
}

</mosaic_0001>

<llo_original>
// kernel: mobilenetv2_seg_forward.2
$region0: #{mobilenetv2_seg_forward.2}
  #allocation0 [shape = 'u32[]', space=smem, size = 0x4, offset = 0x4, fixed_abs, tag = 'smem constant byte address 0x4 - core index']
  #allocation1 [shape = 'u32[72,128]{1,0:T(1,128)}', space=vmem, size = 0x9000, scoped, tag = 'internal scratch']
  %s0 = inlined_call_operand.vmem [shape: bf16[2,24,128], index: 0, kind: input, shape index: {}]
  %s1 = inlined_call_operand.vmem [shape: bf16[2,128,128], index: 1, kind: input, shape index: {}]
  %s2 = inlined_call_operand.vmem [shape: bf16[8,24], index: 2, kind: input, shape index: {}]
  %s3 = inlined_call_operand.vmem [shape: bf16[8,128], index: 3, kind: input, shape index: {}]
  %s4 = inlined_call_operand.vmem [shape: f32[8,1], index: 4, kind: input, shape index: {}]
  %s5 = inlined_call_operand.vmem [shape: f32[2,8,128], index: 5, kind: output, shape index: {}]
  %s6 = sld [smem:[#allocation0]]
  $region53: #{mobilenetv2_seg_forward.2} parent=0
    _
  %s8 = ssub.s32 1, %s6
  %s9 = scalar_select 0, %s8, %s6
  loop: start=0, step=1, limit=4
  $region2: #{mobilenetv2_seg_forward.2} parent=0 // loop_pre_header
    _
  $region3: #{mobilenetv2_seg_forward.2} parent=0 // loop_header
    %s11 = sphi 0, %s15
    %p12 = scmp.ge.s32.totalorder %s11, 4
    %s18 = sphi 0, %s30
    %s19 = sphi 0, %s26
    %s20 = sphi 0, %s18
    %s21 = sphi 0, %s19
    %s22 = sphi 0, %s20
    %s23 = sphi 0, %s21
    %s35 = sphi 0, %s37
    %s38 = sphi 0, %s35
    %s39 = sphi 0, %s38
    %s55 = sphi 0, %s39
    %s63 = sphi 0, %s65
    %s66 = sphi 0, %s63
    %s67 = sphi 0, %s66
    %s83 = sphi 0, %s67
    %s87 = sphi 0, %s87
    %s89 = sphi 0, %s87
    %s90 = sphi 0, %s89
    %s104 = sphi 0, %s90
    %s108 = sphi 0, %s108
    %s110 = sphi 0, %s108
    %s111 = sphi 0, %s110
    %s125 = sphi 0, %s111
    %s129 = sphi 0, %s129
    %s131 = sphi 0, %s129
    %s132 = sphi 0, %s131
    %s146 = sphi 0, %s132
    %s154 = sphi 0, %s156
    %s157 = sphi 0, %s154
    %s158 = sphi 0, %s157
    %s174 = sphi 0, %s158
  $region4: #{mobilenetv2_seg_forward.2} parent=0 // loop_header_branch
    %14 = sbr.rel (%p12) target = $region8
  $region5: #{mobilenetv2_seg_forward.2} parent=0 // loop_body
    %s16 = ssub.s32 %s11, 1
    %s17 = ssub.s32 %s11, 2
    %s24 = sadd.s32 1, %s19
    %p25 = scmp.ge.s32.totalorder %s24, 1
    %s26 = scalar_select %p25, 0, %s24
    %s27 = sadd.s32 1, %s18
    %s28 = scalar_select %p25, %s27, %s18
    %p29 = scmp.ge.s32.totalorder %s28, 2
    %s30 = scalar_select %p29, 0, %s28
    %s31 = ssub.s32 %s18, %s30
    %s32 = ssub.s32 %s19, %s26
    %s33 = sor.u32 %s31, %s32
    %p34 = scmp.eq.s32.totalorder %s33, 0
    %s36 = sadd.s32 %s35, 1
    %s37 = scalar_select %p34, %s35, %s36
    %p40 = pneg %p34
    %p41 = scmp.eq.s32.totalorder %s11, 1
    %p42 = por %p40, %p41
    %p43 = scmp.ne.s32.totalorder %s35, %s38
    %p44 = scmp.eq.s32.totalorder %s11, 0
    %p45 = por %p43, %p44
    %p46 = scmp.ne.s32.totalorder %s35, %s38
    %p47 = scmp.eq.s32.totalorder %s16, 1
    %p48 = por %p46, %p47
    %p49 = scmp.ne.s32.totalorder %s38, %s39
    %p50 = scmp.eq.s32.totalorder %s16, 0
    %p51 = por %p49, %p50
    %p52 = scmp.ne.s32.totalorder %s38, %s39
    %p53 = scmp.eq.s32.totalorder %s17, 1
    %p54 = por %p52, %p53
    %p56 = scmp.ne.s32.totalorder %s39, %s55
    %p57 = scmp.eq.s32.totalorder %s17, 0
    %p58 = por %p56, %p57
    %s59 = ssub.s32 %s18, %s30
    %s60 = ssub.s32 %s19, %s26
    %s61 = sor.u32 %s59, %s60
    %p62 = scmp.eq.s32.totalorder %s61, 0
    %s64 = sadd.s32 %s63, 1
    %s65 = scalar_select %p62, %s63, %s64
    %p68 = pneg %p62
    %p69 = scmp.eq.s32.totalorder %s11, 1
    %p70 = por %p68, %p69
    %p71 = scmp.ne.s32.totalorder %s63, %s66
    %p72 = scmp.eq.s32.totalorder %s11, 0
    %p73 = por %p71, %p72
    %p74 = scmp.ne.s32.totalorder %s63, %s66
    %p75 = scmp.eq.s32.totalorder %s16, 1
    %p76 = por %p74, %p75
    %p77 = scmp.ne.s32.totalorder %s66, %s67
    %p78 = scmp.eq.s32.totalorder %s16, 0
    %p79 = por %p77, %p78
    %p80 = scmp.ne.s32.totalorder %s66, %s67
    %p81 = scmp.eq.s32.totalorder %s17, 1
    %p82 = por %p80, %p81
    %p84 = scmp.ne.s32.totalorder %s67, %s83
    %p85 = scmp.eq.s32.totalorder %s17, 0
    %p86 = por %p84, %p85
    %s88 = sadd.s32 %s87, 1
    %p91 = scmp.eq.s32.totalorder %s11, 1
    %p92 = scmp.ne.s32.totalorder %s87, %s89
    %p93 = scmp.eq.s32.totalorder %s11, 0
    %p94 = por %p92, %p93
    %p95 = scmp.ne.s32.totalorder %s87, %s89
    %p96 = scmp.eq.s32.totalorder %s16, 1
    %p97 = por %p95, %p96
    %p98 = scmp.ne.s32.totalorder %s89, %s90
    %p99 = scmp.eq.s32.totalorder %s16, 0
    %p100 = por %p98, %p99
    %p101 = scmp.ne.s32.totalorder %s89, %s90
    %p102 = scmp.eq.s32.totalorder %s17, 1
    %p103 = por %p101, %p102
    %p105 = scmp.ne.s32.totalorder %s90, %s104
    %p106 = scmp.eq.s32.totalorder %s17, 0
    %p107 = por %p105, %p106
    %s109 = sadd.s32 %s108, 1
    %p112 = scmp.eq.s32.totalorder %s11, 1
    %p113 = scmp.ne.s32.totalorder %s108, %s110
    %p114 = scmp.eq.s32.totalorder %s11, 0
    %p115 = por %p113, %p114
    %p116 = scmp.ne.s32.totalorder %s108, %s110
    %p117 = scmp.eq.s32.totalorder %s16, 1
    %p118 = por %p116, %p117
    %p119 = scmp.ne.s32.totalorder %s110, %s111
    %p120 = scmp.eq.s32.totalorder %s16, 0
    %p121 = por %p119, %p120
    %p122 = scmp.ne.s32.totalorder %s110, %s111
    %p123 = scmp.eq.s32.totalorder %s17, 1
    %p124 = por %p122, %p123
    %p126 = scmp.ne.s32.totalorder %s111, %s125
    %p127 = scmp.eq.s32.totalorder %s17, 0
    %p128 = por %p126, %p127
    %s130 = sadd.s32 %s129, 1
    %p133 = scmp.eq.s32.totalorder %s11, 1
    %p134 = scmp.ne.s32.totalorder %s129, %s131
    %p135 = scmp.eq.s32.totalorder %s11, 0
    %p136 = por %p134, %p135
    %p137 = scmp.ne.s32.totalorder %s129, %s131
    %p138 = scmp.eq.s32.totalorder %s16, 1
    %p139 = por %p137, %p138
    %p140 = scmp.ne.s32.totalorder %s131, %s132
    %p141 = scmp.eq.s32.totalorder %s16, 0
    %p142 = por %p140, %p141
    %p143 = scmp.ne.s32.totalorder %s131, %s132
    %p144 = scmp.eq.s32.totalorder %s17, 1
    %p145 = por %p143, %p144
    %p147 = scmp.ne.s32.totalorder %s132, %s146
    %p148 = scmp.eq.s32.totalorder %s17, 0
    %p149 = por %p147, %p148
    %s150 = ssub.s32 %s18, %s30
    %s151 = ssub.s32 %s19, %s26
    %s152 = sor.u32 %s150, %s151
    %p153 = scmp.eq.s32.totalorder %s152, 0
    %s155 = sadd.s32 %s154, 1
    %s156 = scalar_select %p153, %s154, %s155
    %p159 = pneg %p153
    %p160 = scmp.eq.s32.totalorder %s11, 1
    %p161 = por %p159, %p160
    %p162 = scmp.ne.s32.totalorder %s154, %s157
    %p163 = scmp.eq.s32.totalorder %s11, 0
    %p164 = por %p162, %p163
    %p165 = scmp.ne.s32.totalorder %s154, %s157
    %p166 = scmp.eq.s32.totalorder %s16, 1
    %p167 = por %p165, %p166
    %p168 = scmp.ne.s32.totalorder %s157, %s158
    %p169 = scmp.eq.s32.totalorder %s16, 0
    %p170 = por %p168, %p169
    %p171 = scmp.ne.s32.totalorder %s157, %s158
    %p172 = scmp.eq.s32.totalorder %s17, 1
    %p173 = por %p171, %p172
    %p175 = scmp.ne.s32.totalorder %s158, %s174
    %p176 = scmp.eq.s32.totalorder %s17, 0
    %p177 = por %p175, %p176
    %p178 = scmp.le.s32.totalorder 1, %s11
    %p179 = scmp.lt.s32.totalorder %s11, 3
    %p180 = pnand %p178, %p179
    %p181 = pneg %p180
    // Predicated region
    $region9: #{mobilenetv2_seg_forward.2} parent=5 // pred_check
      _
    $region10: #{mobilenetv2_seg_forward.2} parent=5 // pred_check_branch
      %183 = sbr.rel (%p180) target = $region12
    $region11: #{mobilenetv2_seg_forward.2} parent=5 // pred_region
      %s184 = ssub.s32 %s11, 1
      // Predicated region
      $region13: #{mobilenetv2_seg_forward.2} parent=11 // pred_check
        %p185 = pneg %p100
      $region14: #{mobilenetv2_seg_forward.2} parent=11 // pred_check_branch
        %187 = sbr.rel (%p185) target = $region16
      $region15: #{mobilenetv2_seg_forward.2} parent=11 // pred_region
        _
      $region16: #{mobilenetv2_seg_forward.2} parent=11 // pred_fallthru
        _
      // Predicated region
      $region17: #{mobilenetv2_seg_forward.2} parent=11 // pred_check
        %p188 = pneg %p121
      $region18: #{mobilenetv2_seg_forward.2} parent=11 // pred_check_branch
        %190 = sbr.rel (%p188) target = $region20
      $region19: #{mobilenetv2_seg_forward.2} parent=11 // pred_region
        _
      $region20: #{mobilenetv2_seg_forward.2} parent=11 // pred_fallthru
        _
      // Predicated region
      $region21: #{mobilenetv2_seg_forward.2} parent=11 // pred_check
        %p191 = pneg %p142
      $region22: #{mobilenetv2_seg_forward.2} parent=11 // pred_check_branch
        %193 = sbr.rel (%p191) target = $region24
      $region23: #{mobilenetv2_seg_forward.2} parent=11 // pred_region
        _
      $region24: #{mobilenetv2_seg_forward.2} parent=11 // pred_fallthru
        _
    $region12: #{mobilenetv2_seg_forward.2} parent=5 // pred_fallthru
      _
    %p194 = scmp.lt.s32.totalorder %s11, 2
    // Predicated region
    $region25: #{mobilenetv2_seg_forward.2} parent=5 // pred_check
      %p195 = pneg %p194
    $region26: #{mobilenetv2_seg_forward.2} parent=5 // pred_check_branch
      %197 = sbr.rel (%p195) target = $region28
    $region27: #{mobilenetv2_seg_forward.2} parent=5 // pred_region
      // Predicated region
      $region29: #{mobilenetv2_seg_forward.2} parent=27 // pred_check
        %p198 = pneg %p45
      $region30: #{mobilenetv2_seg_forward.2} parent=27 // pred_check_branch
        %200 = sbr.rel (%p198) target = $region32
      $region31: #{mobilenetv2_seg_forward.2} parent=27 // pred_region
        %p201 = scmp.lt.s32.totalorder %s18, 1
        %s202 = scalar_select %p201, %s18, 1
        %p203 = scmp.lt.s32.totalorder %s19, 0
        %s204 = scalar_select %p203, %s19, 0
        %s205 = smul.addr %s202, 3
        %s206 = sadd.s32 %s204, %s205
        %s207 = smul.addr %s206, 4
        %s208 = scalar_lea.vmem %s0, %s207
      $region32: #{mobilenetv2_seg_forward.2} parent=27 // pred_fallthru
        _
      // Predicated region
      $region33: #{mobilenetv2_seg_forward.2} parent=27 // pred_check
        %p209 = pneg %p73
      $region34: #{mobilenetv2_seg_forward.2} parent=27 // pred_check_branch
        %211 = sbr.rel (%p209) target = $region36
      $region35: #{mobilenetv2_seg_forward.2} parent=27 // pred_region
        %p212 = scmp.lt.s32.totalorder %s18, 1
        %s213 = scalar_select %p212, %s18, 1
        %p214 = scmp.lt.s32.totalorder %s19, 0
        %s215 = scalar_select %p214, %s19, 0
        %s216 = smul.addr %s213, 16
        %s217 = sadd.s32 %s215, %s216
        %s218 = smul.addr %s217, 4
        %s219 = scalar_lea.vmem %s1, %s218
      $region36: #{mobilenetv2_seg_forward.2} parent=27 // pred_fallthru
        _
    $region28: #{mobilenetv2_seg_forward.2} parent=5 // pred_fallthru
      _
    %p220 = scmp.le.s32.totalorder 1, %s11
    %p221 = scmp.lt.s32.totalorder %s11, 3
    %p222 = pnand %p220, %p221
    %p223 = pneg %p222
    // Predicated region
    $region37: #{mobilenetv2_seg_forward.2} parent=5 // pred_check
      _
    $region38: #{mobilenetv2_seg_forward.2} parent=5 // pred_check_branch
      %225 = sbr.rel (%p222) target = $region40
    $region39: #{mobilenetv2_seg_forward.2} parent=5 // pred_region
      %s226 = ssub.s32 %s11, 1
      %p227 = scmp.lt.s32.totalorder %s20, 1
      %s228 = scalar_select %p227, %s20, 1
      %p229 = scmp.lt.s32.totalorder %s21, 0
      %s230 = scalar_select %p229, %s21, 0
      %s231 = smul.addr %s228, 3
      %s232 = sadd.s32 %s230, %s231
      %s233 = smul.addr %s232, 4
      %s234 = scalar_lea.vmem %s0, %s233
      %p235 = pneg %p51
      %p236 = pneg %p48
      %p237 = scmp.lt.s32.totalorder %s20, 1
      %s238 = scalar_select %p237, %s20, 1
      %p239 = scmp.lt.s32.totalorder %s21, 0
      %s240 = scalar_select %p239, %s21, 0
      %s241 = smul.addr %s238, 16
      %s242 = sadd.s32 %s240, %s241
      %s243 = smul.addr %s242, 4
      %s244 = scalar_lea.vmem %s1, %s243
      %p245 = pneg %p79
      %p246 = pneg %p76
      %p247 = pneg %p100
      %p248 = pneg %p97
      %p249 = pneg %p121
      %p250 = pneg %p118
      %p251 = pneg %p142
      %p252 = pneg %p139
      %p253 = pneg %p170
      %p254 = pneg %p167
      %p255 = scmp.lt.s32.totalorder %s20, 1
      %s256 = scalar_select %p255, %s20, 1
      %p257 = scmp.lt.s32.totalorder %s21, 0
      %s258 = scalar_select %p257, %s21, 0
      %s259 = sadd.s32 %s258, %s256
      %s260 = smul.addr %s259, 8
      %s261 = scalar_lea.vmem %s5, %s260
      %p262 = scmp.lt.s32.totalorder %s20, 1
      %s263 = scalar_select %p262, %s20, 1
      %p264 = scmp.lt.s32.totalorder %s21, 0
      %s265 = scalar_select %p264, %s21, 0
      %s266 = smul.addr %s263, 3
      %s267 = sadd.s32 %s265, %s266
      %s268 = smul.addr %s267, 4
      %s269 = scalar_lea.vmem %s0, %s268
      %p270 = scmp.lt.s32.totalorder %s20, 1
      %s271 = scalar_select %p270, %s20, 1
      %p272 = scmp.lt.s32.totalorder %s21, 0
      %s273 = scalar_select %p272, %s21, 0
      %s274 = smul.addr %s271, 16
      %s275 = sadd.s32 %s273, %s274
      %s276 = smul.addr %s275, 4
      %s277 = scalar_lea.vmem %s1, %s276
      %p278 = scmp.lt.s32.totalorder %s20, 1
      %s279 = scalar_select %p278, %s20, 1
      %p280 = scmp.lt.s32.totalorder %s21, 0
      %s281 = scalar_select %p280, %s21, 0
      %s282 = sadd.s32 %s281, %s279
      %s283 = smul.addr %s282, 8
      %s284 = scalar_lea.vmem %s5, %s283
      %v286 = vld [vmem:[%s2] sm:$0xf]
      %v287 = vld [vmem:[%s269] sm:$0xf]
      %v288 = vld [vmem:[%s269 + $0x4] sm:$0xf]
      %v289 = vld [vmem:[%s269 + $0x8] sm:$0xf]
      %v290 = vld [vmem:[%s3] sm:$0xf]
      %v291 = vld [vmem:[%s277] sm:$0xf]
      %v292 = vld [vmem:[%s277 + $0x4] sm:$0xf]
      %v293 = vld [vmem:[%s277 + $0x8] sm:$0xf]
      %v294 = vld [vmem:[%s277 + $0xc] sm:$0xf]
      %v295 = vld [vmem:[%s277 + $0x10] sm:$0xf]
      %v296 = vld [vmem:[%s277 + $0x14] sm:$0xf]
      %v297 = vld [vmem:[%s277 + $0x18] sm:$0xf]
      %v298 = vld [vmem:[%s277 + $0x1c] sm:$0xf]
      %v299 = vld [vmem:[%s277 + $0x20] sm:$0xf]
      %v300 = vld [vmem:[%s277 + $0x24] sm:$0xf]
      %v301 = vld [vmem:[%s277 + $0x28] sm:$0xf]
      %v302 = vld [vmem:[%s277 + $0x2c] sm:$0xf]
      %v303 = vld [vmem:[%s277 + $0x30] sm:$0xf]
      %v304 = vld [vmem:[%s277 + $0x34] sm:$0xf]
      %v305 = vld [vmem:[%s277 + $0x38] sm:$0xf]
      %v306 = vld [vmem:[%s277 + $0x3c] sm:$0xf]
      %v323 = vunpack.c.l.b16 %v291
      %v324 = vunpack.c.l.b16 %v292
      %v325 = vunpack.c.l.b16 %v293
      %v326 = vunpack.c.l.b16 %v294
      %v327 = vunpack.c.l.b16 %v295
      %v328 = vunpack.c.l.b16 %v296
      %v329 = vunpack.c.l.b16 %v297
      %v330 = vunpack.c.l.b16 %v298
      %v331 = vunpack.c.l.b16 %v299
      %v332 = vunpack.c.l.b16 %v300
      %v333 = vunpack.c.l.b16 %v301
      %v334 = vunpack.c.l.b16 %v302
      %v335 = vunpack.c.l.b16 %v303
      %v336 = vunpack.c.l.b16 %v304
      %v337 = vunpack.c.l.b16 %v305
      %v338 = vunpack.c.l.b16 %v306
      %v339 = vpack.c.b16 %v324, %v323
      %v340 = vpack.c.b16 %v326, %v325
      %v341 = vpack.c.b16 %v328, %v327
      %v342 = vpack.c.b16 %v330, %v329
      %v343 = vpack.c.b16 %v332, %v331
      %v344 = vpack.c.b16 %v334, %v333
      %v345 = vpack.c.b16 %v336, %v335
      %v346 = vpack.c.b16 %v338, %v337
      %355 = vmatpush.bf16.msra.mxu0 %v346
      %356 = vmatpush.bf16.msra.mxu0 %v345
      %357 = vmatpush.bf16.msra.mxu0 %v344
      %358 = vmatpush.bf16.msra.mxu0 %v343
      %359 = vmatpush.bf16.msra.mxu0 %v342
      %360 = vmatpush.bf16.msra.mxu0 %v341
      %361 = vmatpush.bf16.msra.mxu0 %v340
      %362 = vmatpush.bf16.msra.mxu0 %v339
      %363 = vmatmul.bf16.gmra.mxu0 %v290
      %v364 = vpop.f32.mrf.mxu0
      %v365 = vadd.f32 0.0, %v364
      %v366 = vpop.f32.mrf.mxu0
      %367 = vdwg.mxu0
      %v371 = vunpack.c.l.b16 %v287
      %v372 = vunpack.c.l.b16 %v288
      %v373 = vunpack.c.l.b16 %v289
      %v374 = vpack.c.b16 %v372, %v371
      %v375 = vpack.c.b16 %v373, %v373
      %vm377 = vcmask 195584
      %v379 = vsel %vm377, %v286, 0
      %vm381 = vcmask 1043456
      %v383 = vsel %vm381, %v375, 0
      %385 = vmatpush.bf16.msra.mxu0 0
      %386 = vmatpush.bf16.msra.mxu0 0
      %387 = vmatpush.bf16.msra.mxu0 0
      %388 = vmatpush.bf16.msra.mxu0 0
      %389 = vmatpush.bf16.msra.mxu0 0
      %390 = vmatpush.bf16.msra.mxu0 0
      %391 = vmatpush.bf16.msra.mxu0 %v383
      %392 = vmatpush.bf16.msra.mxu0 %v374
      %393 = vmatmul.bf16.gmra.mxu0 %v379
      %v394 = vpop.f32.mrf.mxu0
      %v395 = vadd.f32 %v365, %v394
      %v396 = vpop.f32.mrf.mxu0
      %397 = vdwg.mxu0
      %v398 = vld [vmem:[%s4] sm:$0xff]
      %400 = vset.pattern.permute.xlu0 0
      %401 = vperm.xlu0 %400, %v398
      %v402 = vpop.permute.xlu0 %401
      %v404 = vadd.f32 %v395, %v402
      %405 = vst [vmem:[%s284] sm:$0xff] %v404
      %p406 = scmp.lt.s32.totalorder %s20, 1
      %s407 = scalar_select %p406, %s20, 1
      %p408 = scmp.lt.s32.totalorder %s21, 0
      %s409 = scalar_select %p408, %s21, 0
      %s410 = sadd.s32 %s409, %s407
      %s411 = smul.addr %s410, 8
      %s412 = scalar_lea.vmem %s5, %s411
      // Predicated region
      $region41: #{mobilenetv2_seg_forward.2} parent=39 // pred_check
        %p413 = pneg %p167
      $region42: #{mobilenetv2_seg_forward.2} parent=39 // pred_check_branch
        %415 = sbr.rel (%p413) target = $region44
      $region43: #{mobilenetv2_seg_forward.2} parent=39 // pred_region
        _
      $region44: #{mobilenetv2_seg_forward.2} parent=39 // pred_fallthru
        _
    $region40: #{mobilenetv2_seg_forward.2} parent=5 // pred_fallthru
      _
    %p416 = scmp.le.s32.totalorder 2, %s11
    // Predicated region
    $region45: #{mobilenetv2_seg_forward.2} parent=5 // pred_check
      %p417 = pneg %p416
    $region46: #{mobilenetv2_seg_forward.2} parent=5 // pred_check_branch
      %419 = sbr.rel (%p417) target = $region48
    $region47: #{mobilenetv2_seg_forward.2} parent=5 // pred_region
      %s420 = ssub.s32 %s11, 2
      // Predicated region
      $region49: #{mobilenetv2_seg_forward.2} parent=47 // pred_check
        %p421 = pneg %p173
      $region50: #{mobilenetv2_seg_forward.2} parent=47 // pred_check_branch
        %423 = sbr.rel (%p421) target = $region52
      $region51: #{mobilenetv2_seg_forward.2} parent=47 // pred_region
        %p424 = scmp.lt.s32.totalorder %s22, 1
        %s425 = scalar_select %p424, %s22, 1
        %p426 = scmp.lt.s32.totalorder %s23, 0
        %s427 = scalar_select %p426, %s23, 0
        %s428 = sadd.s32 %s427, %s425
        %s429 = smul.addr %s428, 8
        %s430 = scalar_lea.vmem %s5, %s429
      $region52: #{mobilenetv2_seg_forward.2} parent=47 // pred_fallthru
        _
    $region48: #{mobilenetv2_seg_forward.2} parent=5 // pred_fallthru
      _
  $region6: #{mobilenetv2_seg_forward.2} parent=0 // loop_footer
    %s15 = sadd.s32 1, %s11
  $region7: #{mobilenetv2_seg_forward.2} parent=0 // loop_footer_branch
    %10 = sbr.rel target = $region3
  $region8: #{mobilenetv2_seg_forward.2} parent=0 // loop_exit
    _

// kernel: mobilenetv2_seg_forward.3
$region0: #{mobilenetv2_seg_forward.3}
  #allocation0 [shape = 'u32[]', space=smem, size = 0x4, offset = 0x4, fixed_abs, tag = 'smem constant byte address 0x4 - core index']
  #allocation1 [shape = 'u32[72,128]{1,0:T(1,128)}', space=vmem, size = 0x9000, scoped, tag = 'internal scratch']
  %s0 = inlined_call_operand.vmem [shape: f32[2,8,4,4], index: 0, kind: input, shape index: {}]
  %s1 = inlined_call_operand.vmem [shape: f32[16,4], index: 1, kind: input, shape index: {}]
  %s2 = inlined_call_operand.vmem [shape: f32[4,16], index: 2, kind: input, shape index: {}]
  %s3 = inlined_call_operand.hbm [shape: f32[2,8,16,16], index: 3, kind: output, shape index: {}]
  %s4 = sld [smem:[#allocation0]]
  $region45: #{mobilenetv2_seg_forward.3} parent=0
    _
  %s6 = ssub.s32 1, %s4
  %s7 = scalar_select 0, %s6, %s4
  $region1: #{mobilenetv2_seg_forward.3} parent=0
    #allocation2 [shape = 'u8[131072]{0}', space=vmem, size = 0x20000, scoped, tag = 'output window, operand 0']
    #allocation3 [shape = 's32[2]{0}', space=sflag, size = 0x8, scoped, tag = 'scoped memory for mobilenetv2_seg_forward.3']
    %8 = vsyncpa [#allocation3], 0
    %s9 = scalar_lea.sflag [#allocation3], 1
    %10 = vsyncpa %s9, 0
    loop: start=0, step=1, limit=4
    $region2: #{mobilenetv2_seg_forward.3} parent=1 // loop_pre_header
      _
    $region3: #{mobilenetv2_seg_forward.3} parent=1 // loop_header
      %s12 = sphi 0, %s16
      %p13 = scmp.ge.s32.totalorder %s12, 4
      %s19 = sphi 0, %s31
      %s20 = sphi 0, %s27
      %s21 = sphi 0, %s19
      %s22 = sphi 0, %s20
      %s23 = sphi 0, %s21
      %s24 = sphi 0, %s22
      %s34 = sphi 0, %s36
      %s37 = sphi 0, %s34
      %s38 = sphi 0, %s37
      %s54 = sphi 0, %s38
      %s60 = sphi 0, %s62
      %s63 = sphi 0, %s60
      %s64 = sphi 0, %s63
      %s80 = sphi 0, %s64
      %s84 = sphi 0, %s84
      %s86 = sphi 0, %s84
      %s87 = sphi 0, %s86
      %s101 = sphi 0, %s87
      %s109 = sphi 0, %s111
      %s112 = sphi 0, %s109
      %s113 = sphi 0, %s112
      %s129 = sphi 0, %s113
    $region4: #{mobilenetv2_seg_forward.3} parent=1 // loop_header_branch
      %15 = sbr.rel (%p13) target = $region8
    $region5: #{mobilenetv2_seg_forward.3} parent=1 // loop_body
      %s17 = ssub.s32 %s12, 1
      %s18 = ssub.s32 %s12, 2
      %s25 = sadd.s32 1, %s20
      %p26 = scmp.ge.s32.totalorder %s25, 1
      %s27 = scalar_select %p26, 0, %s25
      %s28 = sadd.s32 1, %s19
      %s29 = scalar_select %p26, %s28, %s19
      %p30 = scmp.ge.s32.totalorder %s29, 2
      %s31 = scalar_select %p30, 0, %s29
      %s32 = ssub.s32 %s19, %s31
      %p33 = scmp.eq.s32.totalorder %s32, 0
      %s35 = sadd.s32 %s34, 1
      %s36 = scalar_select %p33, %s34, %s35
      %p39 = pneg %p33
      %p40 = scmp.eq.s32.totalorder %s12, 1
      %p41 = por %p39, %p40
      %p42 = scmp.ne.s32.totalorder %s34, %s37
      %p43 = scmp.eq.s32.totalorder %s12, 0
      %p44 = por %p42, %p43
      %p45 = scmp.ne.s32.totalorder %s34, %s37
      %p46 = scmp.eq.s32.totalorder %s17, 1
      %p47 = por %p45, %p46
      %p48 = scmp.ne.s32.totalorder %s37, %s38
      %p49 = scmp.eq.s32.totalorder %s17, 0
      %p50 = por %p48, %p49
      %p51 = scmp.ne.s32.totalorder %s37, %s38
      %p52 = scmp.eq.s32.totalorder %s18, 1
      %p53 = por %p51, %p52
      %p55 = scmp.ne.s32.totalorder %s38, %s54
      %p56 = scmp.eq.s32.totalorder %s18, 0
      %p57 = por %p55, %p56
      %s58 = ssub.s32 %s20, %s27
      %p59 = scmp.eq.s32.totalorder %s58, 0
      %s61 = sadd.s32 %s60, 1
      %s62 = scalar_select %p59, %s60, %s61
      %p65 = pneg %p59
      %p66 = scmp.eq.s32.totalorder %s12, 1
      %p67 = por %p65, %p66
      %p68 = scmp.ne.s32.totalorder %s60, %s63
      %p69 = scmp.eq.s32.totalorder %s12, 0
      %p70 = por %p68, %p69
      %p71 = scmp.ne.s32.totalorder %s60, %s63
      %p72 = scmp.eq.s32.totalorder %s17, 1
      %p73 = por %p71, %p72
      %p74 = scmp.ne.s32.totalorder %s63, %s64
      %p75 = scmp.eq.s32.totalorder %s17, 0
      %p76 = por %p74, %p75
      %p77 = scmp.ne.s32.totalorder %s63, %s64
      %p78 = scmp.eq.s32.totalorder %s18, 1
      %p79 = por %p77, %p78
      %p81 = scmp.ne.s32.totalorder %s64, %s80
      %p82 = scmp.eq.s32.totalorder %s18, 0
      %p83 = por %p81, %p82
      %s85 = sadd.s32 %s84, 1
      %p88 = scmp.eq.s32.totalorder %s12, 1
      %p89 = scmp.ne.s32.totalorder %s84, %s86
      %p90 = scmp.eq.s32.totalorder %s12, 0
      %p91 = por %p89, %p90
      %p92 = scmp.ne.s32.totalorder %s84, %s86
      %p93 = scmp.eq.s32.totalorder %s17, 1
      %p94 = por %p92, %p93
      %p95 = scmp.ne.s32.totalorder %s86, %s87
      %p96 = scmp.eq.s32.totalorder %s17, 0
      %p97 = por %p95, %p96
      %p98 = scmp.ne.s32.totalorder %s86, %s87
      %p99 = scmp.eq.s32.totalorder %s18, 1
      %p100 = por %p98, %p99
      %p102 = scmp.ne.s32.totalorder %s87, %s101
      %p103 = scmp.eq.s32.totalorder %s18, 0
      %p104 = por %p102, %p103
      %s105 = ssub.s32 %s19, %s31
      %s106 = ssub.s32 %s20, %s27
      %s107 = sor.u32 %s105, %s106
      %p108 = scmp.eq.s32.totalorder %s107, 0
      %s110 = sadd.s32 %s109, 1
      %s111 = scalar_select %p108, %s109, %s110
      %p114 = pneg %p108
      %p115 = scmp.eq.s32.totalorder %s12, 1
      %p116 = por %p114, %p115
      %p117 = scmp.ne.s32.totalorder %s109, %s112
      %p118 = scmp.eq.s32.totalorder %s12, 0
      %p119 = por %p117, %p118
      %p120 = scmp.ne.s32.totalorder %s109, %s112
      %p121 = scmp.eq.s32.totalorder %s17, 1
      %p122 = por %p120, %p121
      %p123 = scmp.ne.s32.totalorder %s112, %s113
      %p124 = scmp.eq.s32.totalorder %s17, 0
      %p125 = por %p123, %p124
      %p126 = scmp.ne.s32.totalorder %s112, %s113
      %p127 = scmp.eq.s32.totalorder %s18, 1
      %p128 = por %p126, %p127
      %p130 = scmp.ne.s32.totalorder %s113, %s129
      %p131 = scmp.eq.s32.totalorder %s18, 0
      %p132 = por %p130, %p131
      %p133 = scmp.le.s32.totalorder 1, %s12
      %p134 = scmp.lt.s32.totalorder %s12, 3
      %p135 = pnand %p133, %p134
      %p136 = pneg %p135
      // Predicated region
      $region9: #{mobilenetv2_seg_forward.3} parent=5 // pred_check
        _
      $region10: #{mobilenetv2_seg_forward.3} parent=5 // pred_check_branch
        %138 = sbr.rel (%p135) target = $region12
      $region11: #{mobilenetv2_seg_forward.3} parent=5 // pred_region
        %s139 = ssub.s32 %s12, 1
        // Predicated region
        $region13: #{mobilenetv2_seg_forward.3} parent=11 // pred_check
          %p140 = pneg %p76
        $region14: #{mobilenetv2_seg_forward.3} parent=11 // pred_check_branch
          %142 = sbr.rel (%p140) target = $region16
        $region15: #{mobilenetv2_seg_forward.3} parent=11 // pred_region
          %s143 = smul.u32 2, %s22
          %p144 = scmp.lt.s32.totalorder %s143, 1
          %s145 = scalar_select %p144, %s143, 1
          %s146 = smul.addr %s145, 8
          %s147 = scalar_lea.vmem %s1, %s146
          %s148 = smul.u32 2, %s22
        $region16: #{mobilenetv2_seg_forward.3} parent=11 // pred_fallthru
          _
        // Predicated region
        $region17: #{mobilenetv2_seg_forward.3} parent=11 // pred_check
          %p149 = pneg %p97
        $region18: #{mobilenetv2_seg_forward.3} parent=11 // pred_check_branch
          %151 = sbr.rel (%p149) target = $region20
        $region19: #{mobilenetv2_seg_forward.3} parent=11 // pred_region
          _
        $region20: #{mobilenetv2_seg_forward.3} parent=11 // pred_fallthru
          _
      $region12: #{mobilenetv2_seg_forward.3} parent=5 // pred_fallthru
        _
      %p152 = scmp.lt.s32.totalorder %s12, 2
      // Predicated region
      $region21: #{mobilenetv2_seg_forward.3} parent=5 // pred_check
        %p153 = pneg %p152
      $region22: #{mobilenetv2_seg_forward.3} parent=5 // pred_check_branch
        %155 = sbr.rel (%p153) target = $region24
      $region23: #{mobilenetv2_seg_forward.3} parent=5 // pred_region
        // Predicated region
        $region25: #{mobilenetv2_seg_forward.3} parent=23 // pred_check
          %p156 = pneg %p44
        $region26: #{mobilenetv2_seg_forward.3} parent=23 // pred_check_branch
          %158 = sbr.rel (%p156) target = $region28
        $region27: #{mobilenetv2_seg_forward.3} parent=23 // pred_region
          %p159 = scmp.lt.s32.totalorder %s19, 1
          %s160 = scalar_select %p159, %s19, 1
          %s161 = smul.addr %s160, 8
          %s162 = smul.addr %s161, 4
          %s163 = scalar_lea.vmem %s0, %s162
        $region28: #{mobilenetv2_seg_forward.3} parent=23 // pred_fallthru
          _
      $region24: #{mobilenetv2_seg_forward.3} parent=5 // pred_fallthru
        _
      %p164 = scmp.le.s32.totalorder 1, %s12
      %p165 = scmp.lt.s32.totalorder %s12, 3
      %p166 = pnand %p164, %p165
      %p167 = pneg %p166
      // Predicated region
      $region29: #{mobilenetv2_seg_forward.3} parent=5 // pred_check
        _
      $region30: #{mobilenetv2_seg_forward.3} parent=5 // pred_check_branch
        %169 = sbr.rel (%p166) target = $region32
      $region31: #{mobilenetv2_seg_forward.3} parent=5 // pred_region
        %s170 = ssub.s32 %s12, 1
        %p171 = scmp.lt.s32.totalorder %s21, 1
        %s172 = scalar_select %p171, %s21, 1
        %s173 = smul.addr %s172, 8
        %s174 = smul.addr %s173, 4
        %s175 = scalar_lea.vmem %s0, %s174
        %p176 = pneg %p50
        %p177 = pneg %p47
        %s178 = smul.u32 2, %s22
        %p179 = scmp.lt.s32.totalorder %s178, 1
        %s180 = scalar_select %p179, %s178, 1
        %s181 = smul.addr %s180, 8
        %s182 = scalar_lea.vmem %s1, %s181
        %p183 = pneg %p76
        %p184 = pneg %p73
        %p185 = pneg %p97
        %p186 = pneg %p94
        %p187 = pneg %p125
        %p188 = pneg %p122
        %s189 = sand.u32 %s112, 1
        %s190 = scalar_lea.sflag [#allocation3], %s189
        %s191 = sand.u32 %s112, 1
        %s192 = smul.addr %s191, 128
        %s193 = scalar_lea.vmem [#allocation2], %s192
        %p194 = scmp.lt.s32.totalorder %s21, 1
        %s195 = scalar_select %p194, %s21, 1
        %s196 = smul.addr %s195, 8
        %s197 = smul.addr %s196, 4
        %s198 = scalar_lea.vmem %s0, %s197
        %s199 = smul.u32 2, %s22
        %p200 = scmp.lt.s32.totalorder %s199, 1
        %s201 = scalar_select %p200, %s199, 1
        %s202 = smul.addr %s201, 8
        %s203 = scalar_lea.vmem %s1, %s202
        %s204 = smul.u32 2, %s22
        %s205 = smul.u32 2, %s22
        %v206 = vld [vmem:[%s203] sm:$0xff]
        %v207 = vld [vmem:[%s203 + $0x8] sm:$0xff]
        %v208 = vld [vmem:[%s2] sm:$0xf]
        %v209 = vld [vmem:[%s198] sm:$0xf]
        %vm210 = vcmask 31744
        %v212 = vsel %vm210, %v206, 0
        %v215 = vsel %vm210, %v207, 0
        %vm217 = vcmask 1043456
        %v219 = vsel %vm217, %v209, 0
        %221 = vmatpush.msra.mxu0 0.0
        %222 = vmatpush.msra.mxu0 0.0
        %223 = vmatpush.msra.mxu0 0.0
        %224 = vmatpush.msra.mxu0 0.0
        %225 = vmatpush.msra.mxu0 0.0
        %226 = vmatpush.msra.mxu0 0.0
        %227 = vmatpush.msra.mxu0 0.0
        %228 = vmatpush.msra.mxu0 0.0
        %229 = vmatpush.msra.mxu0 0.0
        %230 = vmatpush.msra.mxu0 0.0
        %231 = vmatpush.msra.mxu0 0.0
        %232 = vmatpush.msra.mxu0 0.0
        %233 = vmatpush.msra.mxu0 0.0
        %234 = vmatpush.msra.mxu0 0.0
        %235 = vmatpush.msra.mxu0 0.0
        %236 = vmatpush.msra.mxu0 %v219
        %237 = vmatmul.f32.gmra.mxu0 %v212
        %v238 = vpop.f32.mrf.mxu0
        %v239 = vadd.f32 0.0, %v238
        %240 = vmatmul.f32.gmra.mxu0 %v215
        %v241 = vpop.f32.mrf.mxu0
        %v242 = vadd.f32 0.0, %v241
        %243 = vdwg.mxu0
        %s244 = scalar_lea.vmem %s198, 4
        %v245 = vld [vmem:[%s244] sm:$0xf]
        %v247 = vsel %vm217, %v245, 0
        %249 = vmatpush.msra.mxu0 0.0
        %250 = vmatpush.msra.mxu0 0.0
        %251 = vmatpush.msra.mxu0 0.0
        %252 = vmatpush.msra.mxu0 0.0
        %253 = vmatpush.msra.mxu0 0.0
        %254 = vmatpush.msra.mxu0 0.0
        %255 = vmatpush.msra.mxu0 0.0
        %256 = vmatpush.msra.mxu0 0.0
        %257 = vmatpush.msra.mxu0 0.0
        %258 = vmatpush.msra.mxu0 0.0
        %259 = vmatpush.msra.mxu0 0.0
        %260 = vmatpush.msra.mxu0 0.0
        %261 = vmatpush.msra.mxu0 0.0
        %262 = vmatpush.msra.mxu0 0.0
        %263 = vmatpush.msra.mxu0 0.0
        %264 = vmatpush.msra.mxu0 %v247
        %265 = vmatmul.f32.gmra.mxu0 %v212
        %v266 = vpop.f32.mrf.mxu0
        %v267 = vadd.f32 0.0, %v266
        %268 = vmatmul.f32.gmra.mxu0 %v215
        %v269 = vpop.f32.mrf.mxu0
        %v270 = vadd.f32 0.0, %v269
        %271 = vdwg.mxu0
        %s272 = scalar_lea.vmem %s198, 8
        %v273 = vld [vmem:[%s272] sm:$0xf]
        %v275 = vsel %vm217, %v273, 0
        %277 = vmatpush.msra.mxu0 0.0
        %278 = vmatpush.msra.mxu0 0.0
        %279 = vmatpush.msra.mxu0 0.0
        %280 = vmatpush.msra.mxu0 0.0
        %281 = vmatpush.msra.mxu0 0.0
        %282 = vmatpush.msra.mxu0 0.0
        %283 = vmatpush.msra.mxu0 0.0
        %284 = vmatpush.msra.mxu0 0.0
        %285 = vmatpush.msra.mxu0 0.0
        %286 = vmatpush.msra.mxu0 0.0
        %287 = vmatpush.msra.mxu0 0.0
        %288 = vmatpush.msra.mxu0 0.0
        %289 = vmatpush.msra.mxu0 0.0
        %290 = vmatpush.msra.mxu0 0.0
        %291 = vmatpush.msra.mxu0 0.0
        %292 = vmatpush.msra.mxu0 %v275
        %293 = vmatmul.f32.gmra.mxu0 %v212
        %v294 = vpop.f32.mrf.mxu0
        %v295 = vadd.f32 0.0, %v294
        %296 = vmatmul.f32.gmra.mxu0 %v215
        %v297 = vpop.f32.mrf.mxu0
        %v298 = vadd.f32 0.0, %v297
        %299 = vdwg.mxu0
        %s300 = scalar_lea.vmem %s198, 12
        %v301 = vld [vmem:[%s300] sm:$0xf]
        %v303 = vsel %vm217, %v301, 0
        %305 = vmatpush.msra.mxu0 0.0
        %306 = vmatpush.msra.mxu0 0.0
        %307 = vmatpush.msra.mxu0 0.0
        %308 = vmatpush.msra.mxu0 0.0
        %309 = vmatpush.msra.mxu0 0.0
        %310 = vmatpush.msra.mxu0 0.0
        %311 = vmatpush.msra.mxu0 0.0
        %312 = vmatpush.msra.mxu0 0.0
        %313 = vmatpush.msra.mxu0 0.0
        %314 = vmatpush.msra.mxu0 0.0
        %315 = vmatpush.msra.mxu0 0.0
        %316 = vmatpush.msra.mxu0 0.0
        %317 = vmatpush.msra.mxu0 0.0
        %318 = vmatpush.msra.mxu0 0.0
        %319 = vmatpush.msra.mxu0 0.0
        %320 = vmatpush.msra.mxu0 %v303
        %321 = vmatmul.f32.gmra.mxu0 %v212
        %v322 = vpop.f32.mrf.mxu0
        %v323 = vadd.f32 0.0, %v322
        %324 = vmatmul.f32.gmra.mxu0 %v215
        %v325 = vpop.f32.mrf.mxu0
        %v326 = vadd.f32 0.0, %v325
        %327 = vdwg.mxu0
        %s328 = scalar_lea.vmem %s198, 16
        %v329 = vld [vmem:[%s328] sm:$0xf]
        %v331 = vsel %vm217, %v329, 0
        %333 = vmatpush.msra.mxu0 0.0
        %334 = vmatpush.msra.mxu0 0.0
        %335 = vmatpush.msra.mxu0 0.0
        %336 = vmatpush.msra.mxu0 0.0
        %337 = vmatpush.msra.mxu0 0.0
        %338 = vmatpush.msra.mxu0 0.0
        %339 = vmatpush.msra.mxu0 0.0
        %340 = vmatpush.msra.mxu0 0.0
        %341 = vmatpush.msra.mxu0 0.0
        %342 = vmatpush.msra.mxu0 0.0
        %343 = vmatpush.msra.mxu0 0.0
        %344 = vmatpush.msra.mxu0 0.0
        %345 = vmatpush.msra.mxu0 0.0
        %346 = vmatpush.msra.mxu0 0.0
        %347 = vmatpush.msra.mxu0 0.0
        %348 = vmatpush.msra.mxu0 %v331
        %349 = vmatmul.f32.gmra.mxu0 %v212
        %v350 = vpop.f32.mrf.mxu0
        %v351 = vadd.f32 0.0, %v350
        %352 = vmatmul.f32.gmra.mxu0 %v215
        %v353 = vpop.f32.mrf.mxu0
        %v354 = vadd.f32 0.0, %v353
        %355 = vdwg.mxu0
        %s356 = scalar_lea.vmem %s198, 20
        %v357 = vld [vmem:[%s356] sm:$0xf]
        %v359 = vsel %vm217, %v357, 0
        %361 = vmatpush.msra.mxu0 0.0
        %362 = vmatpush.msra.mxu0 0.0
        %363 = vmatpush.msra.mxu0 0.0
        %364 = vmatpush.msra.mxu0 0.0
        %365 = vmatpush.msra.mxu0 0.0
        %366 = vmatpush.msra.mxu0 0.0
        %367 = vmatpush.msra.mxu0 0.0
        %368 = vmatpush.msra.mxu0 0.0
        %369 = vmatpush.msra.mxu0 0.0
        %370 = vmatpush.msra.mxu0 0.0
        %371 = vmatpush.msra.mxu0 0.0
        %372 = vmatpush.msra.mxu0 0.0
        %373 = vmatpush.msra.mxu0 0.0
        %374 = vmatpush.msra.mxu0 0.0
        %375 = vmatpush.msra.mxu0 0.0
        %376 = vmatpush.msra.mxu0 %v359
        %377 = vmatmul.f32.gmra.mxu0 %v212
        %v378 = vpop.f32.mrf.mxu0
        %v379 = vadd.f32 0.0, %v378
        %380 = vmatmul.f32.gmra.mxu0 %v215
        %v381 = vpop.f32.mrf.mxu0
        %v382 = vadd.f32 0.0, %v381
        %383 = vdwg.mxu0
        %s384 = scalar_lea.vmem %s198, 24
        %v385 = vld [vmem:[%s384] sm:$0xf]
        %v387 = vsel %vm217, %v385, 0
        %389 = vmatpush.msra.mxu0 0.0
        %390 = vmatpush.msra.mxu0 0.0
        %391 = vmatpush.msra.mxu0 0.0
        %392 = vmatpush.msra.mxu0 0.0
        %393 = vmatpush.msra.mxu0 0.0
        %394 = vmatpush.msra.mxu0 0.0
        %395 = vmatpush.msra.mxu0 0.0
        %396 = vmatpush.msra.mxu0 0.0
        %397 = vmatpush.msra.mxu0 0.0
        %398 = vmatpush.msra.mxu0 0.0
        %399 = vmatpush.msra.mxu0 0.0
        %400 = vmatpush.msra.mxu0 0.0
        %401 = vmatpush.msra.mxu0 0.0
        %402 = vmatpush.msra.mxu0 0.0
        %403 = vmatpush.msra.mxu0 0.0
        %404 = vmatpush.msra.mxu0 %v387
        %405 = vmatmul.f32.gmra.mxu0 %v212
        %v406 = vpop.f32.mrf.mxu0
        %v407 = vadd.f32 0.0, %v406
        %408 = vmatmul.f32.gmra.mxu0 %v215
        %v409 = vpop.f32.mrf.mxu0
        %v410 = vadd.f32 0.0, %v409
        %411 = vdwg.mxu0
        %s412 = scalar_lea.vmem %s198, 28
        %v413 = vld [vmem:[%s412] sm:$0xf]
        %v415 = vsel %vm217, %v413, 0
        %417 = vmatpush.msra.mxu0 0.0
        %418 = vmatpush.msra.mxu0 0.0
        %419 = vmatpush.msra.mxu0 0.0
        %420 = vmatpush.msra.mxu0 0.0
        %421 = vmatpush.msra.mxu0 0.0
        %422 = vmatpush.msra.mxu0 0.0
        %423 = vmatpush.msra.mxu0 0.0
        %424 = vmatpush.msra.mxu0 0.0
        %425 = vmatpush.msra.mxu0 0.0
        %426 = vmatpush.msra.mxu0 0.0
        %427 = vmatpush.msra.mxu0 0.0
        %428 = vmatpush.msra.mxu0 0.0
        %429 = vmatpush.msra.mxu0 0.0
        %430 = vmatpush.msra.mxu0 0.0
        %431 = vmatpush.msra.mxu0 0.0
        %432 = vmatpush.msra.mxu0 %v415
        %433 = vmatmul.f32.gmra.mxu0 %v212
        %v434 = vpop.f32.mrf.mxu0
        %v435 = vadd.f32 0.0, %v434
        %436 = vmatmul.f32.gmra.mxu0 %v215
        %v437 = vpop.f32.mrf.mxu0
        %v438 = vadd.f32 0.0, %v437
        %439 = vdwg.mxu0
        %v441 = vsel %vm210, %v239, 0
        %v444 = vsel %vm210, %v242, 0
        %v447 = vsel %vm210, %v267, 0
        %v450 = vsel %vm210, %v270, 0
        %v453 = vsel %vm210, %v295, 0
        %v456 = vsel %vm210, %v298, 0
        %v459 = vsel %vm210, %v323, 0
        %v462 = vsel %vm210, %v326, 0
        %v465 = vsel %vm210, %v351, 0
        %v468 = vsel %vm210, %v354, 0
        %v471 = vsel %vm210, %v379, 0
        %v474 = vsel %vm210, %v382, 0
        %v477 = vsel %vm210, %v407, 0
        %v480 = vsel %vm210, %v410, 0
        %v483 = vsel %vm210, %v435, 0
        %v486 = vsel %vm210, %v438, 0
        %v489 = vsel %vm217, %v208, 0
        %491 = vmatpush.msra.mxu0 0.0
        %492 = vmatpush.msra.mxu0 0.0
        %493 = vmatpush.msra.mxu0 0.0
        %494 = vmatpush.msra.mxu0 0.0
        %495 = vmatpush.msra.mxu0 0.0
        %496 = vmatpush.msra.mxu0 0.0
        %497 = vmatpush.msra.mxu0 0.0
        %498 = vmatpush.msra.mxu0 0.0
        %499 = vmatpush.msra.mxu0 0.0
        %500 = vmatpush.msra.mxu0 0.0
        %501 = vmatpush.msra.mxu0 0.0
        %502 = vmatpush.msra.mxu0 0.0
        %503 = vmatpush.msra.mxu0 0.0
        %504 = vmatpush.msra.mxu0 0.0
        %505 = vmatpush.msra.mxu0 0.0
        %506 = vmatpush.msra.mxu0 %v489
        %507 = vmatmul.f32.gmra.mxu0 %v441
        %v508 = vpop.f32.mrf.mxu0
        %v509 = vadd.f32 0.0, %v508
        %510 = vmatmul.f32.gmra.mxu0 %v444
        %v511 = vpop.f32.mrf.mxu0
        %v512 = vadd.f32 0.0, %v511
        %513 = vmatmul.f32.gmra.mxu0 %v447
        %v514 = vpop.f32.mrf.mxu0
        %v515 = vadd.f32 0.0, %v514
        %516 = vmatmul.f32.gmra.mxu0 %v450
        %v517 = vpop.f32.mrf.mxu0
        %v518 = vadd.f32 0.0, %v517
        %519 = vmatmul.f32.gmra.mxu0 %v453
        %v520 = vpop.f32.mrf.mxu0
        %v521 = vadd.f32 0.0, %v520
        %522 = vmatmul.f32.gmra.mxu0 %v456
        %v523 = vpop.f32.mrf.mxu0
        %v524 = vadd.f32 0.0, %v523
        %525 = vmatmul.f32.gmra.mxu0 %v459
        %v526 = vpop.f32.mrf.mxu0
        %v527 = vadd.f32 0.0, %v526
        %528 = vmatmul.f32.gmra.mxu0 %v462
        %v529 = vpop.f32.mrf.mxu0
        %v530 = vadd.f32 0.0, %v529
        %531 = vmatmul.f32.gmra.mxu0 %v465
        %v532 = vpop.f32.mrf.mxu0
        %v533 = vadd.f32 0.0, %v532
        %534 = vmatmul.f32.gmra.mxu0 %v468
        %v535 = vpop.f32.mrf.mxu0
        %v536 = vadd.f32 0.0, %v535
        %537 = vmatmul.f32.gmra.mxu0 %v471
        %v538 = vpop.f32.mrf.mxu0
        %v539 = vadd.f32 0.0, %v538
        %540 = vmatmul.f32.gmra.mxu0 %v474
        %v541 = vpop.f32.mrf.mxu0
        %v542 = vadd.f32 0.0, %v541
        %543 = vmatmul.f32.gmra.mxu0 %v477
        %v544 = vpop.f32.mrf.mxu0
        %v545 = vadd.f32 0.0, %v544
        %546 = vmatmul.f32.gmra.mxu0 %v480
        %v547 = vpop.f32.mrf.mxu0
        %v548 = vadd.f32 0.0, %v547
        %549 = vmatmul.f32.gmra.mxu0 %v483
        %v550 = vpop.f32.mrf.mxu0
        %v551 = vadd.f32 0.0, %v550
        %552 = vmatmul.f32.gmra.mxu0 %v486
        %v553 = vpop.f32.mrf.mxu0
        %v554 = vadd.f32 0.0, %v553
        %555 = vdwg.mxu0
        %vm556 = vcmask 130048
        %557 = vst.msk [vmem:[%s193] sm:$0xff] %vm556, %v509
        %558 = vst.msk [vmem:[%s193 + $0x8] sm:$0xff] %vm556, %v512
        %559 = vst.msk [vmem:[%s193 + $0x10] sm:$0xff] %vm556, %v515
        %560 = vst.msk [vmem:[%s193 + $0x18] sm:$0xff] %vm556, %v518
        %561 = vst.msk [vmem:[%s193 + $0x20] sm:$0xff] %vm556, %v521
        %562 = vst.msk [vmem:[%s193 + $0x28] sm:$0xff] %vm556, %v524
        %563 = vst.msk [vmem:[%s193 + $0x30] sm:$0xff] %vm556, %v527
        %564 = vst.msk [vmem:[%s193 + $0x38] sm:$0xff] %vm556, %v530
        %565 = vst.msk [vmem:[%s193 + $0x40] sm:$0xff] %vm556, %v533
        %566 = vst.msk [vmem:[%s193 + $0x48] sm:$0xff] %vm556, %v536
        %567 = vst.msk [vmem:[%s193 + $0x50] sm:$0xff] %vm556, %v539
        %568 = vst.msk [vmem:[%s193 + $0x58] sm:$0xff] %vm556, %v542
        %569 = vst.msk [vmem:[%s193 + $0x60] sm:$0xff] %vm556, %v545
        %570 = vst.msk [vmem:[%s193 + $0x68] sm:$0xff] %vm556, %v548
        %571 = vst.msk [vmem:[%s193 + $0x70] sm:$0xff] %vm556, %v551
        %572 = vst.msk [vmem:[%s193 + $0x78] sm:$0xff] %vm556, %v554
        %s573 = sand.u32 %s112, 1
        %s574 = scalar_lea.sflag [#allocation3], %s573
        %s575 = sand.u32 %s112, 1
        %s576 = smul.addr %s575, 128
        %s577 = scalar_lea.vmem [#allocation2], %s576
        // Predicated region
        $region33: #{mobilenetv2_seg_forward.3} parent=31 // pred_check
          %p578 = pneg %p122
        $region34: #{mobilenetv2_seg_forward.3} parent=31 // pred_check_branch
          %580 = sbr.rel (%p578) target = $region36
        $region35: #{mobilenetv2_seg_forward.3} parent=31 // pred_region
          %s581 = smul.u32 2, %s22
          %583 = vsyncadd %s574, 0
          %s584 = smul.addr %s21, 16
          %s585 = sadd.s32 %s581, %s584
          %s586 = smul.addr %s585, 8
          %s587 = scalar_lea.hbm %s3, %s586
          %s588 = sshll.u32 %s577, 4
          %s589 = int_to_ptr.vmem [resolvable:$true] %s588
          %s590 = sshll.u32 %s587, 4
          %s591 = int_to_ptr.hbm [resolvable:$true] %s590
          %596 = dma.vmem_to_hbm [thread:$0]  %s589, 2048, %s591, %s574, 128, 128, 8
        $region36: #{mobilenetv2_seg_forward.3} parent=31 // pred_fallthru
          _
      $region32: #{mobilenetv2_seg_forward.3} parent=5 // pred_fallthru
        _
      %p597 = scmp.le.s32.totalorder 2, %s12
      // Predicated region
      $region37: #{mobilenetv2_seg_forward.3} parent=5 // pred_check
        %p598 = pneg %p597
      $region38: #{mobilenetv2_seg_forward.3} parent=5 // pred_check_branch
        %600 = sbr.rel (%p598) target = $region40
      $region39: #{mobilenetv2_seg_forward.3} parent=5 // pred_region
        %s601 = ssub.s32 %s12, 2
        // Predicated region
        $region41: #{mobilenetv2_seg_forward.3} parent=39 // pred_check
          %p602 = pneg %p128
        $region42: #{mobilenetv2_seg_forward.3} parent=39 // pred_check_branch
          %604 = sbr.rel (%p602) target = $region44
        $region43: #{mobilenetv2_seg_forward.3} parent=39 // pred_region
          %s605 = sand.u32 %s113, 1
          %s606 = scalar_lea.sflag [#allocation3], %s605
          %s607 = sand.u32 %s113, 1
          %s608 = smul.addr %s607, 128
          %s609 = scalar_lea.vmem [#allocation2], %s608
          %611 = dma.done %s606, 2048
        $region44: #{mobilenetv2_seg_forward.3} parent=39 // pred_fallthru
          _
      $region40: #{mobilenetv2_seg_forward.3} parent=5 // pred_fallthru
        _
    $region6: #{mobilenetv2_seg_forward.3} parent=1 // loop_footer
      %s16 = sadd.s32 1, %s12
    $region7: #{mobilenetv2_seg_forward.3} parent=1 // loop_footer_branch
      %11 = sbr.rel target = $region3
    $region8: #{mobilenetv2_seg_forward.3} parent=1 // loop_exit
      _
    %612 = vsyncpa [#allocation3], 1
    %s613 = scalar_lea.sflag [#allocation3], 1
    %614 = vsyncpa %s613, 1

</llo_original>
